<compile_context>
chip_gen: v7x
topology: tpu7x:2x2x1
jax: 0.10.0
libtpu: 0.0.40
codegen_flags: <defaults>
</compile_context>

<pallas_src>
import jax
import jax.numpy as jnp
from jax.experimental import pallas as pl
from jax.experimental.pallas import tpu as pltpu

# OGB's get_atom_feature_dims() (ogb.utils.features):
ATOM_FEATURE_DIMS = [119, 5, 12, 12, 10, 6, 6, 2, 2]
IN_DIM = sum(ATOM_FEATURE_DIMS)  # 174


def _round_up(v, m):
    return (v + m - 1) // m * m


def _linear_kernel(x_ref, w_ref, b_ref, o_ref):
    # x_ref: (tm, k_pad) bf16   w_ref: (k_pad, e_pad) bf16   b_ref: (1, e_pad) f32
    # o_ref: (tm, e_pad) f32 — lane-dense (e_pad % 128 == 0) full-width stores.
    acc = jnp.dot(x_ref[...], w_ref[...], preferred_element_type=jnp.float32)
    o_ref[...] = (acc + b_ref[...]).astype(o_ref.dtype)


def atom_encoder_forward(x, weight, bias, *, tm=1024, compute_dtype=jnp.bfloat16):
    """y = x @ weight + bias, tiled over the atom (row) axis.

    x:      (N, in_dim)        float32
    weight: (in_dim, emb_dim)  float32   (== torch Linear.weight.T)
    bias:   (emb_dim,)         float32

    Handles arbitrary N / emb_dim / in_dim by zero-padding to lane-aligned
    shapes inside the wrapper (fused by XLA with the bf16 cast) and slicing
    the result.
    """
    n, in_dim = x.shape
    in_dim_w, emb_dim = weight.shape
    assert in_dim == in_dim_w

    # Lane-align the contraction and output axes (multiples of 128).
    k_pad = _round_up(in_dim, 128)      # 174 -> 256
    e_pad = _round_up(emb_dim, 128)     # e.g. 32 -> 128

    # Row tile: as large as requested, but no bigger than needed (sublane-
    # aligned).  Rows are zero-padded up to a whole number of tiles (at most
    # tm_eff - 1 extra rows, negligible vs. the streamed x traffic).
    tm_eff = min(tm, _round_up(max(n, 1), 8))
    n_pad = _round_up(max(n, 1), tm_eff)

    # Zero-padded, bf16 operands (zeros in the padded K region contribute 0).
    x_p = jnp.zeros((n_pad, k_pad), compute_dtype)
    x_p = x_p.at[:n, :in_dim].set(x.astype(compute_dtype))
    w_p = jnp.zeros((k_pad, e_pad), compute_dtype)
    w_p = w_p.at[:in_dim, :emb_dim].set(weight.astype(compute_dtype))
    b_p = jnp.zeros((1, e_pad), jnp.float32)
    b_p = b_p.at[0, :emb_dim].set(bias.astype(jnp.float32))

    out = pl.pallas_call(
        _linear_kernel,
        out_shape=jax.ShapeDtypeStruct((n_pad, e_pad), x.dtype),
        grid_spec=pltpu.PrefetchScalarGridSpec(
            num_scalar_prefetch=0,
            grid=(n_pad // tm_eff,),
            in_specs=[
                # streamed row tile of x
                pl.BlockSpec((tm_eff, k_pad), lambda i: (i, 0)),
                # full weight, resident across the grid
                pl.BlockSpec((k_pad, e_pad), lambda i: (0, 0)),
                # bias, resident across the grid
                pl.BlockSpec((1, e_pad), lambda i: (0, 0)),
            ],
            out_specs=pl.BlockSpec((tm_eff, e_pad), lambda i: (i, 0)),
        ),
        compiler_params=pltpu.CompilerParams(
            dimension_semantics=("parallel",),
        ),
    )(x_p, w_p, b_p)

    return out[:n, :emb_dim]


if __name__ == "__main__":
    emb_dim = 32
    num_atoms = 13  # deliberately ragged (not a multiple of 8) to exercise padding

    key = jax.random.PRNGKey(0)
    kx, kw, kb = jax.random.split(key, 3)

    # Deterministic synthetic parameters (torch Linear init shape: (emb_dim, in_dim))
    bound = 1.0 / (IN_DIM ** 0.5)
    w_torch_layout = jax.random.uniform(
        kw, (emb_dim, IN_DIM), jnp.float32, minval=-bound, maxval=bound
    )
    bias = jax.random.uniform(
        kb, (emb_dim,), jnp.float32, minval=-bound, maxval=bound
    )
    weight = w_torch_layout.T  # (in_dim, emb_dim) for the kernel

    x = jax.random.normal(kx, (num_atoms, IN_DIM), jnp.float32)

    y = atom_encoder_forward(x, weight, bias)
    jax.block_until_ready(y)
    assert y.shape == (num_atoms, emb_dim)

    # Reference 1: same bf16 input rounding, f32 accumulation (tight check of
    # the kernel's linear algebra).
    x_q = x.astype(jnp.bfloat16).astype(jnp.float32)
    w_q = weight.astype(jnp.bfloat16).astype(jnp.float32)
    y_ref_q = x_q @ w_q + bias
    assert jnp.allclose(y, y_ref_q, atol=1e-3, rtol=1e-3)

    # Reference 2: pure f32 math (loose check that bf16 casting is benign).
    y_ref = x @ weight + bias
    assert jnp.allclose(y, y_ref, atol=5e-2, rtol=5e-2)

    print("KERNEL_OK")
</pallas_src>

<mosaic_0001>
module attributes {stable_mosaic.version = 11 : i64} {
  func.func @_linear_kernel(%arg0: i32, %arg1: memref<16x256xbf16, #tpu.memory_space<vmem>>, %arg2: memref<256x128xbf16, #tpu.memory_space<vmem>>, %arg3: memref<1x128xf32, #tpu.memory_space<vmem>>, %arg4: memref<16x128xf32, #tpu.memory_space<vmem>>) attributes {dimension_semantics = [#tpu.dimension_semantics<parallel>], iteration_bounds = array<i64: 1>, scalar_prefetch = 0 : i64, scratch_operands = 0 : i64, tpu.core_type = #tpu.core_type<tc>, window_params = [{transform_indices = @transform_0, window_bounds = array<i64: 16, 256>}, {pipeline_mode = #tpu.pipeline_mode<synchronous>, transform_indices = @transform_1, window_bounds = array<i64: 256, 128>}, {pipeline_mode = #tpu.pipeline_mode<synchronous>, transform_indices = @transform_2, window_bounds = array<i64: 1, 128>}, {transform_indices = @transform_3, window_bounds = array<i64: 16, 128>}]} {
    %c0 = arith.constant 0 : index
    %c0_0 = arith.constant 0 : index
    %0 = vector.load %arg1[%c0, %c0_0] : memref<16x256xbf16, #tpu.memory_space<vmem>>, vector<16x256xbf16>
    %c0_1 = arith.constant 0 : index
    %c0_2 = arith.constant 0 : index
    %1 = vector.load %arg2[%c0_1, %c0_2] : memref<256x128xbf16, #tpu.memory_space<vmem>>, vector<256x128xbf16>
    %cst = arith.constant dense<0.000000e+00> : vector<16x128xf32>
    %2 = tpu.matmul %0, %1, %cst {dimension_numbers = #tpu.dot_dimension_numbers<[1], [0], [0], [1], [0, 0, 1, 1], [], []>} : vector<16x256xbf16>, vector<256x128xbf16>, vector<16x128xf32> -> vector<16x128xf32>
    %c0_3 = arith.constant 0 : index
    %c0_4 = arith.constant 0 : index
    %3 = vector.load %arg3[%c0_3, %c0_4] : memref<1x128xf32, #tpu.memory_space<vmem>>, vector<1x128xf32>
    %4 = vector.broadcast %3 : vector<1x128xf32> to vector<16x128xf32>
    %5 = arith.addf %2, %4 : vector<16x128xf32>
    %c0_5 = arith.constant 0 : index
    %c0_6 = arith.constant 0 : index
    %6 = vector.load %arg4[%c0_5, %c0_6] : memref<16x128xf32, #tpu.memory_space<vmem>>, vector<16x128xf32>
    tpu.vector_store %arg4[%c0_5, %c0_6], %5 {strides = array<i32>} : memref<16x128xf32, #tpu.memory_space<vmem>>, vector<16x128xf32>,
    return
  }
  func.func @transform_0(%arg0: i32) -> (i32, i32) {
    %c0_i32 = arith.constant 0 : i32
    %c0_i32_0 = arith.constant 0 : i32
    return %arg0, %c0_i32 : i32, i32
  }
  func.func @transform_1(%arg0: i32) -> (i32, i32) {
    %c0_i32 = arith.constant 0 : i32
    %c0_i32_0 = arith.constant 0 : i32
    %c0_i32_1 = arith.constant 0 : i32
    return %c0_i32, %c0_i32_0 : i32, i32
  }
  func.func @transform_2(%arg0: i32) -> (i32, i32) {
    %c0_i32 = arith.constant 0 : i32
    %c0_i32_0 = arith.constant 0 : i32
    %c0_i32_1 = arith.constant 0 : i32
    return %c0_i32, %c0_i32_0 : i32, i32
  }
  func.func @transform_3(%arg0: i32) -> (i32, i32) {
    %c0_i32 = arith.constant 0 : i32
    %c0_i32_0 = arith.constant 0 : i32
    return %arg0, %c0_i32 : i32, i32
  }
}

</mosaic_0001>

<llo_original>
// kernel: tpu_custom_call.1
$region0: #{tpu_custom_call.1}
  #allocation0 [shape = 'u32[]', space=smem, size = 0x4, offset = 0x4, fixed_abs, tag = 'smem constant byte address 0x4 - core index']
  #allocation1 [shape = 'u32[144,128]{1,0:T(1,128)}', space=vmem, size = 0x12000, scoped, tag = 'internal scratch']
  %s0 = inlined_call_operand.hbm [shape: bf16[16,256], index: 0, kind: input, shape index: {}]
  %s1 = inlined_call_operand.hbm [shape: bf16[256,128], index: 1, kind: input, shape index: {}]
  %s2 = inlined_call_operand.vmem [shape: f32[1,128], index: 2, kind: input, shape index: {}]
  %s3 = inlined_call_operand.hbm [shape: f32[16,128], index: 3, kind: output, shape index: {}]
  %s4 = sld [smem:[#allocation0]]
  $region30: #{tpu_custom_call.1} parent=0
    _
  %s6 = ssub.s32 1, %s4
  %s7 = scalar_select 0, %s6, %s4
  $region1: #{tpu_custom_call.1} parent=0
    #allocation2 [shape = 'u8[8192]{0}', space=vmem, size = 0x2000, scoped, tag = 'input window, operand 0, single buffered']
    #allocation3 [shape = 's32[1]{0}', space=sflag, size = 0x4, scoped, tag = 'scoped memory for tpu_custom_call.1']
    #allocation4 [shape = 's32[1]{0}', space=sflag, size = 0x4, scoped, tag = 'scoped memory for tpu_custom_call.1']
    #allocation5 [shape = 'u8[65536]{0}', space=vmem, size = 0x10000, scoped, tag = 'input window, operand 1, single buffered']
    #allocation6 [shape = 's32[1]{0}', space=sflag, size = 0x4, scoped, tag = 'scoped memory for tpu_custom_call.1']
    #allocation7 [shape = 'u8[8192]{0}', space=vmem, size = 0x2000, scoped, tag = 'output window, operand 0, single buffered']
    %8 = vsyncpa [#allocation3], 0
    %9 = vsyncpa [#allocation6], 0
    %10 = vsyncpa [#allocation4], 0
    // Predicated region
    $region2: #{tpu_custom_call.1} parent=1 // pred_check
      _
    $region3: #{tpu_custom_call.1} parent=1 // pred_check_branch
      %12 = sbr.rel (0) target = $region5
    $region4: #{tpu_custom_call.1} parent=1 // pred_region
      %s14 = ssub.s32 256, 256
      %15 = vsyncadd [#allocation3], %s14
      %s16 = sshll.u32 [#allocation2], 4
      %s17 = int_to_ptr.vmem [resolvable:$true] %s16
      %22 = dma.hbm_to_vmem [thread:$0]  %s0, 256, %s17, [#allocation3], 128, 128, 8
    $region5: #{tpu_custom_call.1} parent=1 // pred_fallthru
      _
    // Predicated region
    $region6: #{tpu_custom_call.1} parent=1 // pred_check
      _
    $region7: #{tpu_custom_call.1} parent=1 // pred_check_branch
      %24 = sbr.rel (0) target = $region9
    $region8: #{tpu_custom_call.1} parent=1 // pred_region
      %s26 = ssub.s32 2048, 2048
      %27 = vsyncadd [#allocation6], %s26
      %s28 = sshll.u32 [#allocation5], 4
      %s29 = int_to_ptr.vmem [resolvable:$true] %s28
      %34 = dma.hbm_to_vmem [thread:$0]  %s1, 2048, %s29, [#allocation6], 64, 64, 4
    $region9: #{tpu_custom_call.1} parent=1 // pred_fallthru
      _
    // Predicated region
    $region10: #{tpu_custom_call.1} parent=1 // pred_check
      _
    $region11: #{tpu_custom_call.1} parent=1 // pred_check_branch
      %36 = sbr.rel (0) target = $region13
    $region12: #{tpu_custom_call.1} parent=1 // pred_region
      _
    $region13: #{tpu_custom_call.1} parent=1 // pred_fallthru
      _
    // Predicated region
    $region14: #{tpu_custom_call.1} parent=1 // pred_check
      _
    $region15: #{tpu_custom_call.1} parent=1 // pred_check_branch
      %38 = sbr.rel (0) target = $region17
    $region16: #{tpu_custom_call.1} parent=1 // pred_region
      %39 = dma.done [#allocation3], 256
    $region17: #{tpu_custom_call.1} parent=1 // pred_fallthru
      _
    // Predicated region
    $region18: #{tpu_custom_call.1} parent=1 // pred_check
      _
    $region19: #{tpu_custom_call.1} parent=1 // pred_check_branch
      %41 = sbr.rel (0) target = $region21
    $region20: #{tpu_custom_call.1} parent=1 // pred_region
      %42 = dma.done [#allocation6], 2048
    $region21: #{tpu_custom_call.1} parent=1 // pred_fallthru
      _
    %v44 = vld [vmem:[#allocation2] sm:$0xff]
    %v45 = vld [vmem:[#allocation2 + $0x8] sm:$0xff]
    %v46 = vld [vmem:[#allocation5] sm:$0xf]
    %v47 = vld [vmem:[#allocation5 + $0x4] sm:$0xf]
    %v48 = vld [vmem:[#allocation5 + $0x8] sm:$0xf]
    %v49 = vld [vmem:[#allocation5 + $0xc] sm:$0xf]
    %v50 = vld [vmem:[#allocation5 + $0x10] sm:$0xf]
    %v51 = vld [vmem:[#allocation5 + $0x14] sm:$0xf]
    %v52 = vld [vmem:[#allocation5 + $0x18] sm:$0xf]
    %v53 = vld [vmem:[#allocation5 + $0x1c] sm:$0xf]
    %v54 = vld [vmem:[#allocation5 + $0x20] sm:$0xf]
    %v55 = vld [vmem:[#allocation5 + $0x24] sm:$0xf]
    %v56 = vld [vmem:[#allocation5 + $0x28] sm:$0xf]
    %v57 = vld [vmem:[#allocation5 + $0x2c] sm:$0xf]
    %v58 = vld [vmem:[#allocation5 + $0x30] sm:$0xf]
    %v59 = vld [vmem:[#allocation5 + $0x34] sm:$0xf]
    %v60 = vld [vmem:[#allocation5 + $0x38] sm:$0xf]
    %v61 = vld [vmem:[#allocation5 + $0x3c] sm:$0xf]
    %v62 = vld [vmem:[#allocation5 + $0x40] sm:$0xf]
    %v63 = vld [vmem:[#allocation5 + $0x44] sm:$0xf]
    %v64 = vld [vmem:[#allocation5 + $0x48] sm:$0xf]
    %v65 = vld [vmem:[#allocation5 + $0x4c] sm:$0xf]
    %v66 = vld [vmem:[#allocation5 + $0x50] sm:$0xf]
    %v67 = vld [vmem:[#allocation5 + $0x54] sm:$0xf]
    %v68 = vld [vmem:[#allocation5 + $0x58] sm:$0xf]
    %v69 = vld [vmem:[#allocation5 + $0x5c] sm:$0xf]
    %v70 = vld [vmem:[#allocation5 + $0x60] sm:$0xf]
    %v71 = vld [vmem:[#allocation5 + $0x64] sm:$0xf]
    %v72 = vld [vmem:[#allocation5 + $0x68] sm:$0xf]
    %v73 = vld [vmem:[#allocation5 + $0x6c] sm:$0xf]
    %v74 = vld [vmem:[#allocation5 + $0x70] sm:$0xf]
    %v75 = vld [vmem:[#allocation5 + $0x74] sm:$0xf]
    %v76 = vld [vmem:[#allocation5 + $0x78] sm:$0xf]
    %v77 = vld [vmem:[#allocation5 + $0x7c] sm:$0xf]
    %v78 = vld [vmem:[%s2] sm:$0x1]
    %v80 = vlaneseq
    %v81 = vshrl.u32 %v80, 7
    %v82 = vsub.s32 0, %v81
    %v83 = vrot.slane %v78, %v82
    %v87 = vunpack.c.l.b16 %v44
    %v88 = vunpack.c.h.b16 %v44
    %v89 = vunpack.c.l.b16 %v45
    %v90 = vunpack.c.h.b16 %v45
    %v91 = vpack.c.b16 %v89, %v87
    %v92 = vpack.c.b16 %v90, %v88
    %v127 = vunpack.c.l.b16 %v46
    %v128 = vunpack.c.l.b16 %v47
    %v129 = vunpack.c.l.b16 %v48
    %v130 = vunpack.c.l.b16 %v49
    %v131 = vunpack.c.l.b16 %v50
    %v132 = vunpack.c.l.b16 %v51
    %v133 = vunpack.c.l.b16 %v52
    %v134 = vunpack.c.l.b16 %v53
    %v135 = vunpack.c.l.b16 %v54
    %v136 = vunpack.c.l.b16 %v55
    %v137 = vunpack.c.l.b16 %v56
    %v138 = vunpack.c.l.b16 %v57
    %v139 = vunpack.c.l.b16 %v58
    %v140 = vunpack.c.l.b16 %v59
    %v141 = vunpack.c.l.b16 %v60
    %v142 = vunpack.c.l.b16 %v61
    %v143 = vunpack.c.l.b16 %v62
    %v144 = vunpack.c.l.b16 %v63
    %v145 = vunpack.c.l.b16 %v64
    %v146 = vunpack.c.l.b16 %v65
    %v147 = vunpack.c.l.b16 %v66
    %v148 = vunpack.c.l.b16 %v67
    %v149 = vunpack.c.l.b16 %v68
    %v150 = vunpack.c.l.b16 %v69
    %v151 = vunpack.c.l.b16 %v70
    %v152 = vunpack.c.l.b16 %v71
    %v153 = vunpack.c.l.b16 %v72
    %v154 = vunpack.c.l.b16 %v73
    %v155 = vunpack.c.l.b16 %v74
    %v156 = vunpack.c.l.b16 %v75
    %v157 = vunpack.c.l.b16 %v76
    %v158 = vunpack.c.l.b16 %v77
    %v159 = vpack.c.b16 %v128, %v127
    %v160 = vpack.c.b16 %v130, %v129
    %v161 = vpack.c.b16 %v132, %v131
    %v162 = vpack.c.b16 %v134, %v133
    %v163 = vpack.c.b16 %v136, %v135
    %v164 = vpack.c.b16 %v138, %v137
    %v165 = vpack.c.b16 %v140, %v139
    %v166 = vpack.c.b16 %v142, %v141
    %v167 = vpack.c.b16 %v144, %v143
    %v168 = vpack.c.b16 %v146, %v145
    %v169 = vpack.c.b16 %v148, %v147
    %v170 = vpack.c.b16 %v150, %v149
    %v171 = vpack.c.b16 %v152, %v151
    %v172 = vpack.c.b16 %v154, %v153
    %v173 = vpack.c.b16 %v156, %v155
    %v174 = vpack.c.b16 %v158, %v157
    %191 = vmatprep.subr.bf16.mxu0 0
    %192 = vmatpush1.bf16.msra.mxu0 %v159
    %193 = vmatprep.subr.bf16.mxu0 0
    %194 = vmatpush1.bf16.msra.mxu0 %v160
    %195 = vmatprep.subr.bf16.mxu0 0
    %196 = vmatpush1.bf16.msra.mxu0 %v161
    %197 = vmatprep.subr.bf16.mxu0 0
    %198 = vmatpush1.bf16.msra.mxu0 %v162
    %199 = vmatprep.subr.bf16.mxu0 0
    %200 = vmatpush1.bf16.msra.mxu0 %v163
    %201 = vmatprep.subr.bf16.mxu0 0
    %202 = vmatpush1.bf16.msra.mxu0 %v164
    %203 = vmatprep.subr.bf16.mxu0 0
    %204 = vmatpush1.bf16.msra.mxu0 %v165
    %205 = vmatprep.subr.bf16.mxu0 0
    %206 = vmatpush1.bf16.msra.mxu0 %v166
    %207 = vmatprep.subr.bf16.mxu0 0
    %208 = vmatpush1.bf16.msra.mxu0 %v167
    %209 = vmatprep.subr.bf16.mxu0 0
    %210 = vmatpush1.bf16.msra.mxu0 %v168
    %211 = vmatprep.subr.bf16.mxu0 0
    %212 = vmatpush1.bf16.msra.mxu0 %v169
    %213 = vmatprep.subr.bf16.mxu0 0
    %214 = vmatpush1.bf16.msra.mxu0 %v170
    %215 = vmatprep.subr.bf16.mxu0 0
    %216 = vmatpush1.bf16.msra.mxu0 %v171
    %217 = vmatprep.subr.bf16.mxu0 0
    %218 = vmatpush1.bf16.msra.mxu0 %v172
    %219 = vmatprep.subr.bf16.mxu0 0
    %220 = vmatpush1.bf16.msra.mxu0 %v173
    %221 = vmatprep.subr.bf16.mxu0 0
    %222 = vmatpush1.bf16.msra.mxu0 %v174
    %223 = vmatprep.mubr.bf16.mxu0 %v92
    %224 = vmatmul.mubr.bf16.gmra.mrb[0].mxu0 %v91
    %v225 = vpop.f32.mrb[0].mxu0
    %v226 = vadd.f32 %v83, %v225
    %v227 = vpop.f32.mrb[0].mxu0
    %v228 = vpop.f32.mrb[0].mxu0
    %v229 = vadd.f32 %v83, %v228
    %v230 = vpop.f32.mrb[0].mxu0
    %231 = vdwg.mxu0
    %232 = vst [vmem:[#allocation7] sm:$0xff] %v226
    %233 = vst [vmem:[#allocation7 + $0x8] sm:$0xff] %v229
    // Predicated region
    $region22: #{tpu_custom_call.1} parent=1 // pred_check
      _
    $region23: #{tpu_custom_call.1} parent=1 // pred_check_branch
      %235 = sbr.rel (0) target = $region25
    $region24: #{tpu_custom_call.1} parent=1 // pred_region
      %s237 = ssub.s32 256, 256
      %238 = vsyncadd [#allocation4], %s237
      %s239 = sshll.u32 [#allocation7], 4
      %s240 = int_to_ptr.vmem [resolvable:$true] %s239
      %245 = dma.vmem_to_hbm [thread:$0]  %s240, 256, %s3, [#allocation4], 128, 128, 8
    $region25: #{tpu_custom_call.1} parent=1 // pred_fallthru
      _
    // Predicated region
    $region26: #{tpu_custom_call.1} parent=1 // pred_check
      _
    $region27: #{tpu_custom_call.1} parent=1 // pred_check_branch
      %247 = sbr.rel (0) target = $region29
    $region28: #{tpu_custom_call.1} parent=1 // pred_region
      %248 = dma.done [#allocation4], 256
    $region29: #{tpu_custom_call.1} parent=1 // pred_fallthru
      _
    %249 = vsyncpa [#allocation3], 1
    %250 = vsyncpa [#allocation6], 1
    %251 = vsyncpa [#allocation4], 1

</llo_original>
